<compile_context>
chip_gen: v7x
topology: tpu7x:2x2x1
jax: 0.10.0
libtpu: 0.0.40
codegen_flags: <defaults>
</compile_context>

<pallas_src>
import functools

import jax
import jax.numpy as jnp
from jax.experimental import pallas as pl
from jax.experimental.pallas import tpu as pltpu


def _round_up(x, m):
    return (x + m - 1) // m * m


def _pick_vmem_limit(default=32 * 1024 * 1024):
    """Per-generation scoped-VMEM limit: ~3/4 of physical, capped at 100 MiB."""
    try:
        info = pltpu.get_tpu_info()
        cap = getattr(info, "vmem_capacity_bytes", None)
        if not cap:
            return default
        return int(min(100 * 1024 * 1024, (cap * 3) // 4))
    except Exception:
        return default


def _fc_kernel(x_ref, w1_ref, b1_ref, wl_ref, bl_ref, o_ref, acc_ref, *,
               num_hidden):
    # x_ref:   (tn, tk)      flattened utterance tile (lane-dense, K on lanes)
    # w1_ref:  (tk, Ep)      first-layer weight tile (in x out layout)
    # b1_ref:  (1, Ep)
    # wl_ref:  (Lp, Ep, Ep)  resident hidden-layer weights
    # bl_ref:  (Lp, 1, Ep)   resident hidden-layer biases
    # o_ref:   (tn, Ep)
    # acc_ref: (tn, Ep) f32 scratch, persists across the K (reduction) axis
    ki = pl.program_id(1)

    @pl.when(ki == 0)
    def _init():
        # Fold the first-layer bias into the accumulator init.
        acc_ref[...] = jnp.broadcast_to(b1_ref[...], acc_ref.shape)

    # One fat MXU matmul per grid step (K-depth = tk >= 128), f32 accumulate.
    acc_ref[...] += jnp.dot(x_ref[...], w1_ref[...],
                            preferred_element_type=jnp.float32)

    @pl.when(ki == pl.num_programs(1) - 1)
    def _finalize():
        h = acc_ref[...]
        for i in range(num_hidden):  # Dropout (identity, eval) -> Tanh -> Linear
            h = jnp.tanh(h)
            h = jnp.dot(h, wl_ref[i],
                        preferred_element_type=jnp.float32) + bl_ref[i]
        o_ref[...] = h.astype(o_ref.dtype)


def fc_model_forward(utts, w1, b1, wl, bl, *, tn_max=512,
                     weight_dtype=jnp.float32):
    """utts: [M, N, V] f32; w1: [M*V, E] (in x out); b1: [E];
    wl: [L, E, E]; bl: [L, E].  Returns [N, E] (eval-mode dropout)."""
    M, N, V = utts.shape
    K = M * V
    E = w1.shape[1]
    L = wl.shape[0]

    vmem_limit = _pick_vmem_limit()
    # ~40% of the scoped limit for the double-buffered x + w1 streams; the
    # rest covers the f32 accumulator, (double-buffered) output and the
    # resident hidden-layer weights/biases.
    stream_budget = max(8 * 1024 * 1024, int(0.4 * vmem_limit))

    # Lane-dense embedding width, sublane-aligned batch.  One batch tile
    # whenever it fits (=> single pass over the w1 HBM stream).
    Ep = _round_up(max(E, 1), 128)
    Np8 = _round_up(max(N, 1), 8)
    tn = Np8 if Np8 <= tn_max else tn_max
    Np = _round_up(Np8, tn)

    # K tile: multiple of 128 (lane-dense x tiles, sublane-aligned w1 tiles),
    # sized so the double-buffered x (tn, tk) + w1 (tk, Ep) streams fit the
    # budget, clamped to the padded K extent.
    tk = max(128, (stream_budget // (2 * 4 * (tn + Ep)) // 128) * 128)
    tk = min(tk, _round_up(K, 128))
    Kp = _round_up(K, tk)

    # Flatten to the PyTorch view [N, M*V]; zero-pad batch/K/E.  Padded K
    # rows/cols contribute 0 to the contraction; padded E columns stay exactly
    # 0 through bias-add, tanh and the hidden matmuls; padded batch rows are
    # sliced off below.
    x2 = jnp.transpose(utts, (1, 0, 2)).reshape(N, K).astype(jnp.float32)
    x2 = jnp.pad(x2, ((0, Np - N), (0, Kp - K))).astype(weight_dtype)
    w1p = jnp.pad(w1.astype(jnp.float32),
                  ((0, Kp - K), (0, Ep - E))).astype(weight_dtype)
    b1p = jnp.pad(b1.reshape(1, E).astype(jnp.float32), ((0, 0), (0, Ep - E)))
    if L > 0:
        wlp = jnp.pad(wl.astype(jnp.float32),
                      ((0, 0), (0, Ep - E), (0, Ep - E))).astype(weight_dtype)
        blp = jnp.pad(bl.reshape(L, 1, E).astype(jnp.float32),
                      ((0, 0), (0, 0), (0, Ep - E)))
        Lp = L
    else:  # num_layers == 1: no hidden blocks; pass dummy resident tensors.
        wlp = jnp.zeros((1, Ep, Ep), weight_dtype)
        blp = jnp.zeros((1, 1, Ep), jnp.float32)
        Lp = 1

    grid = (Np // tn, Kp // tk)  # (batch tiles: parallel, K: reduction)

    cost = pl.CostEstimate(
        flops=int(2 * N * (K * E + L * E * E)),
        transcendentals=int(N * E * L),
        bytes_accessed=int(4 * (N * K + K * E + L * E * E + (L + 1) * E + N * E)),
    )

    kernel = functools.partial(_fc_kernel, num_hidden=L)
    out = pl.pallas_call(
        kernel,
        out_shape=jax.ShapeDtypeStruct((Np, Ep), jnp.float32),
        grid=grid,
        in_specs=[
            pl.BlockSpec((tn, tk), lambda ni, ki: (ni, ki)),
            pl.BlockSpec((tk, Ep), lambda ni, ki: (ki, 0)),
            pl.BlockSpec((1, Ep), lambda ni, ki: (0, 0)),
            pl.BlockSpec((Lp, Ep, Ep), lambda ni, ki: (0, 0, 0)),
            pl.BlockSpec((Lp, 1, Ep), lambda ni, ki: (0, 0, 0)),
        ],
        out_specs=pl.BlockSpec((tn, Ep), lambda ni, ki: (ni, 0)),
        scratch_shapes=[pltpu.VMEM((tn, Ep), jnp.float32)],
        compiler_params=pltpu.CompilerParams(
            dimension_semantics=("parallel", "arbitrary"),
            vmem_limit_bytes=vmem_limit),
        cost_estimate=cost,
    )(x2, w1p, b1p, wlp, blp)
    return out[:N, :E]


def init_params(key, vocab_size, in_seq_len, embedding_size, num_layers):
    """Deterministic nn.Linear-style init: U(-1/sqrt(fan_in), +1/sqrt(fan_in))."""
    in_feat = in_seq_len * vocab_size
    E = embedding_size
    k1, k2, k3, k4 = jax.random.split(key, 4)
    bound1 = 1.0 / jnp.sqrt(in_feat)
    w1 = jax.random.uniform(k1, (in_feat, E), jnp.float32, -bound1, bound1)
    b1 = jax.random.uniform(k2, (E,), jnp.float32, -bound1, bound1)
    num_hidden = num_layers - 1
    bound2 = 1.0 / jnp.sqrt(E)
    wl = jax.random.uniform(k3, (num_hidden, E, E), jnp.float32, -bound2, bound2)
    bl = jax.random.uniform(k4, (num_hidden, E), jnp.float32, -bound2, bound2)
    return w1, b1, wl, bl


def reference_forward(utts, w1, b1, wl, bl):
    """Pure-JAX reference of the PyTorch forward (eval mode)."""
    M, N, V = utts.shape
    x = jnp.transpose(utts, (1, 0, 2)).reshape(N, M * V)
    h = x @ w1 + b1
    for i in range(wl.shape[0]):
        h = jnp.tanh(h)  # Dropout is identity in eval
        h = h @ wl[i] + bl[i]
    return h


if __name__ == "__main__":
    # Small shapes consistent with the module.
    vocab_size = 8
    in_seq_len = 8
    embedding_size = 32
    num_layers = 3
    batch_size = 2

    key = jax.random.PRNGKey(0)
    k_utt, k_par = jax.random.split(key)
    utts = jax.random.normal(
        k_utt, (in_seq_len, batch_size, vocab_size), jnp.float32)  # [M, N, V]
    w1, b1, wl, bl = init_params(
        k_par, vocab_size, in_seq_len, embedding_size, num_layers)

    out = fc_model_forward(utts, w1, b1, wl, bl)  # f32 weights: bit-accurate path
    out = jax.block_until_ready(out)

    ref = reference_forward(utts, w1, b1, wl, bl)
    assert out.shape == (batch_size, embedding_size)
    assert jnp.allclose(out, ref, atol=1e-5, rtol=1e-5), "mismatch vs reference"
    print("KERNEL_OK")
</pallas_src>

<mosaic_0001>
module attributes {stable_mosaic.version = 11 : i64} {
  func.func @_fc_kernel(%arg0: i32, %arg1: i32, %arg2: memref<8x128xf32, #tpu.memory_space<vmem>>, %arg3: memref<128x128xf32, #tpu.memory_space<vmem>>, %arg4: memref<1x128xf32, #tpu.memory_space<vmem>>, %arg5: memref<2x128x128xf32, #tpu.memory_space<vmem>>, %arg6: memref<2x1x128xf32, #tpu.memory_space<vmem>>, %arg7: memref<8x128xf32, #tpu.memory_space<vmem>>, %arg8: memref<8x128xf32, #tpu.memory_space<vmem>>) attributes {dimension_semantics = [#tpu.dimension_semantics<parallel>, #tpu.dimension_semantics<arbitrary>], iteration_bounds = array<i64: 1, 1>, scalar_prefetch = 0 : i64, scratch_operands = 1 : i64, tpu.core_type = #tpu.core_type<tc>, window_params = [{transform_indices = @transform_0, window_bounds = array<i64: 8, 128>}, {transform_indices = @transform_1, window_bounds = array<i64: 128, 128>}, {pipeline_mode = #tpu.pipeline_mode<synchronous>, transform_indices = @transform_2, window_bounds = array<i64: 1, 128>}, {pipeline_mode = #tpu.pipeline_mode<synchronous>, transform_indices = @transform_3, window_bounds = array<i64: 2, 128, 128>}, {pipeline_mode = #tpu.pipeline_mode<synchronous>, transform_indices = @transform_4, window_bounds = array<i64: 2, 1, 128>}, {transform_indices = @transform_5, window_bounds = array<i64: 8, 128>}]} {
    %c0_i32 = arith.constant 0 : i32
    %0 = arith.cmpi eq, %arg1, %c0_i32 : i32
    %1 = arith.extui %0 : i1 to i32
    %c0_i32_0 = arith.constant 0 : i32
    %2 = arith.cmpi ne, %1, %c0_i32_0 : i32
    scf.if %2 {
      %c0_10 = arith.constant 0 : index
      %c0_11 = arith.constant 0 : index
      %12 = vector.load %arg4[%c0_10, %c0_11] : memref<1x128xf32, #tpu.memory_space<vmem>>, vector<1x128xf32>
      %13 = vector.shape_cast %12 : vector<1x128xf32> to vector<1x128xf32>
      %14 = vector.broadcast %13 : vector<1x128xf32> to vector<8x128xf32>
      %c0_12 = arith.constant 0 : index
      %c0_13 = arith.constant 0 : index
      %15 = vector.load %arg8[%c0_12, %c0_13] : memref<8x128xf32, #tpu.memory_space<vmem>>, vector<8x128xf32>
      tpu.vector_store %arg8[%c0_12, %c0_13], %14 {strides = array<i32>} : memref<8x128xf32, #tpu.memory_space<vmem>>, vector<8x128xf32>,
    } else {
    }
    %c0 = arith.constant 0 : index
    %c0_1 = arith.constant 0 : index
    %3 = vector.load %arg8[%c0, %c0_1] : memref<8x128xf32, #tpu.memory_space<vmem>>, vector<8x128xf32>
    %c0_2 = arith.constant 0 : index
    %c0_3 = arith.constant 0 : index
    %4 = vector.load %arg2[%c0_2, %c0_3] : memref<8x128xf32, #tpu.memory_space<vmem>>, vector<8x128xf32>
    %c0_4 = arith.constant 0 : index
    %c0_5 = arith.constant 0 : index
    %5 = vector.load %arg3[%c0_4, %c0_5] : memref<128x128xf32, #tpu.memory_space<vmem>>, vector<128x128xf32>
    %cst = arith.constant dense<0.000000e+00> : vector<8x128xf32>
    %6 = tpu.matmul %4, %5, %cst {dimension_numbers = #tpu.dot_dimension_numbers<[1], [0], [0], [1], [0, 0, 1, 1], [], []>} : vector<8x128xf32>, vector<128x128xf32>, vector<8x128xf32> -> vector<8x128xf32>
    %7 = arith.addf %3, %6 : vector<8x128xf32>
    %c0_6 = arith.constant 0 : index
    %c0_7 = arith.constant 0 : index
    %8 = vector.load %arg8[%c0_6, %c0_7] : memref<8x128xf32, #tpu.memory_space<vmem>>, vector<8x128xf32>
    tpu.vector_store %arg8[%c0_6, %c0_7], %7 {strides = array<i32>} : memref<8x128xf32, #tpu.memory_space<vmem>>, vector<8x128xf32>,
    %c0_i32_8 = arith.constant 0 : i32
    %9 = arith.cmpi eq, %arg1, %c0_i32_8 : i32
    %10 = arith.extui %9 : i1 to i32
    %c0_i32_9 = arith.constant 0 : i32
    %11 = arith.cmpi ne, %10, %c0_i32_9 : i32
    scf.if %11 {
      %c0_10 = arith.constant 0 : index
      %c0_11 = arith.constant 0 : index
      %12 = vector.load %arg8[%c0_10, %c0_11] : memref<8x128xf32, #tpu.memory_space<vmem>>, vector<8x128xf32>
      %13 = math.tanh %12 : vector<8x128xf32>
      %c0_12 = arith.constant 0 : index
      %c0_13 = arith.constant 0 : index
      %c0_14 = arith.constant 0 : index
      %14 = vector.load %arg5[%c0_12, %c0_13, %c0_14] : memref<2x128x128xf32, #tpu.memory_space<vmem>>, vector<1x128x128xf32>
      %15 = vector.shape_cast %14 : vector<1x128x128xf32> to vector<128x128xf32>
      %cst_15 = arith.constant dense<0.000000e+00> : vector<8x128xf32>
      %16 = tpu.matmul %13, %15, %cst_15 {dimension_numbers = #tpu.dot_dimension_numbers<[1], [0], [0], [1], [0, 0, 1, 1], [], []>} : vector<8x128xf32>, vector<128x128xf32>, vector<8x128xf32> -> vector<8x128xf32>
      %c0_16 = arith.constant 0 : index
      %c0_17 = arith.constant 0 : index
      %c0_18 = arith.constant 0 : index
      %17 = vector.load %arg6[%c0_16, %c0_17, %c0_18] : memref<2x1x128xf32, #tpu.memory_space<vmem>>, vector<1x1x128xf32>
      %18 = vector.shape_cast %17 : vector<1x1x128xf32> to vector<1x128xf32>
      %19 = vector.broadcast %18 : vector<1x128xf32> to vector<8x128xf32>
      %20 = arith.addf %16, %19 : vector<8x128xf32>
      %21 = math.tanh %20 : vector<8x128xf32>
      %c1 = arith.constant 1 : index
      %c0_19 = arith.constant 0 : index
      %c0_20 = arith.constant 0 : index
      %22 = vector.load %arg5[%c1, %c0_19, %c0_20] : memref<2x128x128xf32, #tpu.memory_space<vmem>>, vector<1x128x128xf32>
      %23 = vector.shape_cast %22 : vector<1x128x128xf32> to vector<128x128xf32>
      %cst_21 = arith.constant dense<0.000000e+00> : vector<8x128xf32>
      %24 = tpu.matmul %21, %23, %cst_21 {dimension_numbers = #tpu.dot_dimension_numbers<[1], [0], [0], [1], [0, 0, 1, 1], [], []>} : vector<8x128xf32>, vector<128x128xf32>, vector<8x128xf32> -> vector<8x128xf32>
      %c1_22 = arith.constant 1 : index
      %c0_23 = arith.constant 0 : index
      %c0_24 = arith.constant 0 : index
      %25 = vector.load %arg6[%c1_22, %c0_23, %c0_24] : memref<2x1x128xf32, #tpu.memory_space<vmem>>, vector<1x1x128xf32>
      %26 = vector.shape_cast %25 : vector<1x1x128xf32> to vector<1x128xf32>
      %27 = vector.broadcast %26 : vector<1x128xf32> to vector<8x128xf32>
      %28 = arith.addf %24, %27 : vector<8x128xf32>
      %c0_25 = arith.constant 0 : index
      %c0_26 = arith.constant 0 : index
      %29 = vector.load %arg7[%c0_25, %c0_26] : memref<8x128xf32, #tpu.memory_space<vmem>>, vector<8x128xf32>
      tpu.vector_store %arg7[%c0_25, %c0_26], %28 {strides = array<i32>} : memref<8x128xf32, #tpu.memory_space<vmem>>, vector<8x128xf32>,
    } else {
    }
    return
  }
  func.func @transform_0(%arg0: i32, %arg1: i32) -> (i32, i32) {
    %c0_i32 = arith.constant 0 : i32
    return %arg0, %arg1 : i32, i32
  }
  func.func @transform_1(%arg0: i32, %arg1: i32) -> (i32, i32) {
    %c0_i32 = arith.constant 0 : i32
    %c0_i32_0 = arith.constant 0 : i32
    return %arg1, %c0_i32 : i32, i32
  }
  func.func @transform_2(%arg0: i32, %arg1: i32) -> (i32, i32) {
    %c0_i32 = arith.constant 0 : i32
    %c0_i32_0 = arith.constant 0 : i32
    %c0_i32_1 = arith.constant 0 : i32
    return %c0_i32, %c0_i32_0 : i32, i32
  }
  func.func @transform_3(%arg0: i32, %arg1: i32) -> (i32, i32, i32) {
    %c0_i32 = arith.constant 0 : i32
    %c0_i32_0 = arith.constant 0 : i32
    %c0_i32_1 = arith.constant 0 : i32
    %c0_i32_2 = arith.constant 0 : i32
    return %c0_i32, %c0_i32_0, %c0_i32_1 : i32, i32, i32
  }
  func.func @transform_4(%arg0: i32, %arg1: i32) -> (i32, i32, i32) {
    %c0_i32 = arith.constant 0 : i32
    %c0_i32_0 = arith.constant 0 : i32
    %c0_i32_1 = arith.constant 0 : i32
    %c0_i32_2 = arith.constant 0 : i32
    return %c0_i32, %c0_i32_0, %c0_i32_1 : i32, i32, i32
  }
  func.func @transform_5(%arg0: i32, %arg1: i32) -> (i32, i32) {
    %c0_i32 = arith.constant 0 : i32
    %c0_i32_0 = arith.constant 0 : i32
    return %arg0, %c0_i32 : i32, i32
  }
}

</mosaic_0001>

<llo_original>
// kernel: tpu_custom_call.1
$region0: #{tpu_custom_call.1}
  #allocation0 [shape = 'u32[]', space=smem, size = 0x4, offset = 0x4, fixed_abs, tag = 'smem constant byte address 0x4 - core index']
  #allocation1 [shape = 'u32[144,128]{1,0:T(1,128)}', space=vmem, size = 0x12000, scoped, tag = 'internal scratch']
  #allocation2 [shape = 'f32[8,128]{1,0:T(8,128)}', space=vmem, size = 0x1000, scoped, tag = 'scratch operand']
  %s0 = inlined_call_operand.hbm [shape: f32[8,128], index: 0, kind: input, shape index: {}]
  %s1 = inlined_call_operand.hbm [shape: f32[128,128], index: 1, kind: input, shape index: {}]
  %s2 = inlined_call_operand.vmem [shape: f32[1,128], index: 2, kind: input, shape index: {}]
  %s3 = inlined_call_operand.hbm [shape: f32[2,128,128], index: 3, kind: input, shape index: {}]
  %s4 = inlined_call_operand.vmem [shape: f32[2,1,128], index: 4, kind: input, shape index: {}]
  %s5 = inlined_call_operand.hbm [shape: f32[8,128], index: 5, kind: output, shape index: {}]
  %s6 = sld [smem:[#allocation0]]
  $region50: #{tpu_custom_call.1} parent=0
    _
  %s8 = ssub.s32 1, %s6
  %s9 = scalar_select 0, %s8, %s6
  $region1: #{tpu_custom_call.1} parent=0
    #allocation3 [shape = 'u8[4096]{0}', space=vmem, size = 0x1000, scoped, tag = 'input window, operand 0, single buffered']
    #allocation4 [shape = 's32[1]{0}', space=sflag, size = 0x4, scoped, tag = 'scoped memory for tpu_custom_call.1']
    #allocation5 [shape = 's32[1]{0}', space=sflag, size = 0x4, scoped, tag = 'scoped memory for tpu_custom_call.1']
    #allocation6 [shape = 'u8[65536]{0}', space=vmem, size = 0x10000, scoped, tag = 'input window, operand 1, single buffered']
    #allocation7 [shape = 's32[1]{0}', space=sflag, size = 0x4, scoped, tag = 'scoped memory for tpu_custom_call.1']
    #allocation8 [shape = 'u8[131072]{0}', space=vmem, size = 0x20000, scoped, tag = 'input window, operand 3, single buffered']
    #allocation9 [shape = 'u8[4096]{0}', space=vmem, size = 0x1000, scoped, tag = 'output window, operand 0, single buffered']
    %10 = vsyncpa [#allocation4], 0
    %11 = vsyncpa [#allocation7], 0
    %12 = vsyncpa [#allocation5], 0
    // Predicated region
    $region2: #{tpu_custom_call.1} parent=1 // pred_check
      _
    $region3: #{tpu_custom_call.1} parent=1 // pred_check_branch
      %14 = sbr.rel (0) target = $region5
    $region4: #{tpu_custom_call.1} parent=1 // pred_region
      %s16 = ssub.s32 128, 128
      %17 = vsyncadd [#allocation4], %s16
      %s19 = sshll.u32 [#allocation3], 4
      %s20 = int_to_ptr.vmem [resolvable:$true] %s19
      %22 = dma.hbm_to_vmem [thread:$0]  %s0, 128, %s20, [#allocation4]
    $region5: #{tpu_custom_call.1} parent=1 // pred_fallthru
      _
    // Predicated region
    $region6: #{tpu_custom_call.1} parent=1 // pred_check
      _
    $region7: #{tpu_custom_call.1} parent=1 // pred_check_branch
      %24 = sbr.rel (0) target = $region9
    $region8: #{tpu_custom_call.1} parent=1 // pred_region
      %s26 = ssub.s32 2048, 2048
      %27 = vsyncadd [#allocation7], %s26
      %s28 = sshll.u32 [#allocation6], 4
      %s29 = int_to_ptr.vmem [resolvable:$true] %s28
      %34 = dma.hbm_to_vmem [thread:$0]  %s1, 2048, %s29, [#allocation7], 128, 128, 8
    $region9: #{tpu_custom_call.1} parent=1 // pred_fallthru
      _
    // Predicated region
    $region10: #{tpu_custom_call.1} parent=1 // pred_check
      _
    $region11: #{tpu_custom_call.1} parent=1 // pred_check_branch
      %36 = sbr.rel (0) target = $region13
    $region12: #{tpu_custom_call.1} parent=1 // pred_region
      _
    $region13: #{tpu_custom_call.1} parent=1 // pred_fallthru
      _
    // Predicated region
    $region14: #{tpu_custom_call.1} parent=1 // pred_check
      _
    $region15: #{tpu_custom_call.1} parent=1 // pred_check_branch
      %38 = sbr.rel (0) target = $region17
    $region16: #{tpu_custom_call.1} parent=1 // pred_region
      %s40 = ssub.s32 4096, 4096
      %41 = vsyncadd [#allocation7], %s40
      %s42 = sshll.u32 [#allocation8], 4
      %s43 = int_to_ptr.vmem [resolvable:$true] %s42
      %48 = dma.hbm_to_vmem [thread:$0]  %s3, 4096, %s43, [#allocation7], 128, 128, 8
    $region17: #{tpu_custom_call.1} parent=1 // pred_fallthru
      _
    // Predicated region
    $region18: #{tpu_custom_call.1} parent=1 // pred_check
      _
    $region19: #{tpu_custom_call.1} parent=1 // pred_check_branch
      %50 = sbr.rel (0) target = $region21
    $region20: #{tpu_custom_call.1} parent=1 // pred_region
      _
    $region21: #{tpu_custom_call.1} parent=1 // pred_fallthru
      _
    // Predicated region
    $region22: #{tpu_custom_call.1} parent=1 // pred_check
      _
    $region23: #{tpu_custom_call.1} parent=1 // pred_check_branch
      %52 = sbr.rel (0) target = $region25
    $region24: #{tpu_custom_call.1} parent=1 // pred_region
      %53 = dma.done [#allocation4], 128
    $region25: #{tpu_custom_call.1} parent=1 // pred_fallthru
      _
    // Predicated region
    $region26: #{tpu_custom_call.1} parent=1 // pred_check
      _
    $region27: #{tpu_custom_call.1} parent=1 // pred_check_branch
      %55 = sbr.rel (0) target = $region29
    $region28: #{tpu_custom_call.1} parent=1 // pred_region
      %56 = dma.done [#allocation7], 2048
    $region29: #{tpu_custom_call.1} parent=1 // pred_fallthru
      _
    // Predicated region
    $region30: #{tpu_custom_call.1} parent=1 // pred_check
      _
    $region31: #{tpu_custom_call.1} parent=1 // pred_check_branch
      %58 = sbr.rel (0) target = $region33
    $region32: #{tpu_custom_call.1} parent=1 // pred_region
      %59 = dma.done [#allocation7], 4096
    $region33: #{tpu_custom_call.1} parent=1 // pred_fallthru
      _
    %p60 = scmp.eq.s32.totalorder 0, 0
    // Predicated region
    $region34: #{tpu_custom_call.1} parent=1 // pred_check
      %p61 = pneg %p60
    $region35: #{tpu_custom_call.1} parent=1 // pred_check_branch
      %63 = sbr.rel (%p61) target = $region37
    $region36: #{tpu_custom_call.1} parent=1 // pred_region
      %v64 = vld [vmem:[%s2] sm:$0x1]
      %v66 = vlaneseq
      %v67 = vshrl.u32 %v66, 7
      %v68 = vsub.s32 0, %v67
      %v69 = vrot.slane %v64, %v68
      %71 = vst [vmem:[#allocation2] sm:$0xff] %v69
    $region37: #{tpu_custom_call.1} parent=1 // pred_fallthru
      _
    %v72 = vld [vmem:[#allocation2] sm:$0xff]
    %v73 = vld [vmem:[#allocation3] sm:$0xff]
    %v74 = vld [vmem:[#allocation6] sm:$0xff]
    %v75 = vld [vmem:[#allocation6 + $0x8] sm:$0xff]
    %v76 = vld [vmem:[#allocation6 + $0x10] sm:$0xff]
    %v77 = vld [vmem:[#allocation6 + $0x18] sm:$0xff]
    %v78 = vld [vmem:[#allocation6 + $0x20] sm:$0xff]
    %v79 = vld [vmem:[#allocation6 + $0x28] sm:$0xff]
    %v80 = vld [vmem:[#allocation6 + $0x30] sm:$0xff]
    %v81 = vld [vmem:[#allocation6 + $0x38] sm:$0xff]
    %v82 = vld [vmem:[#allocation6 + $0x40] sm:$0xff]
    %v83 = vld [vmem:[#allocation6 + $0x48] sm:$0xff]
    %v84 = vld [vmem:[#allocation6 + $0x50] sm:$0xff]
    %v85 = vld [vmem:[#allocation6 + $0x58] sm:$0xff]
    %v86 = vld [vmem:[#allocation6 + $0x60] sm:$0xff]
    %v87 = vld [vmem:[#allocation6 + $0x68] sm:$0xff]
    %v88 = vld [vmem:[#allocation6 + $0x70] sm:$0xff]
    %v89 = vld [vmem:[#allocation6 + $0x78] sm:$0xff]
    %90 = vmatprep.subr.mxu0 0.0
    %91 = vmatpush1.msra.mxu0 %v74
    %92 = vmatprep.subr.mxu0 0.0
    %93 = vmatpush1.msra.mxu0 %v75
    %94 = vmatprep.subr.mxu0 0.0
    %95 = vmatpush1.msra.mxu0 %v76
    %96 = vmatprep.subr.mxu0 0.0
    %97 = vmatpush1.msra.mxu0 %v77
    %98 = vmatprep.subr.mxu0 0.0
    %99 = vmatpush1.msra.mxu0 %v78
    %100 = vmatprep.subr.mxu0 0.0
    %101 = vmatpush1.msra.mxu0 %v79
    %102 = vmatprep.subr.mxu0 0.0
    %103 = vmatpush1.msra.mxu0 %v80
    %104 = vmatprep.subr.mxu0 0.0
    %105 = vmatpush1.msra.mxu0 %v81
    %106 = vmatprep.subr.mxu0 0.0
    %107 = vmatpush1.msra.mxu0 %v82
    %108 = vmatprep.subr.mxu0 0.0
    %109 = vmatpush1.msra.mxu0 %v83
    %110 = vmatprep.subr.mxu0 0.0
    %111 = vmatpush1.msra.mxu0 %v84
    %112 = vmatprep.subr.mxu0 0.0
    %113 = vmatpush1.msra.mxu0 %v85
    %114 = vmatprep.subr.mxu0 0.0
    %115 = vmatpush1.msra.mxu0 %v86
    %116 = vmatprep.subr.mxu0 0.0
    %117 = vmatpush1.msra.mxu0 %v87
    %118 = vmatprep.subr.mxu0 0.0
    %119 = vmatpush1.msra.mxu0 %v88
    %120 = vmatprep.subr.mxu0 0.0
    %121 = vmatpush1.msra.mxu0 %v89
    %122 = vmatprep.subr.mxu0 0.0
    %123 = vmatpush1.msra.mxu0 0.0
    %124 = vmatprep.subr.mxu0 0.0
    %125 = vmatpush1.msra.mxu0 0.0
    %126 = vmatprep.subr.mxu0 0.0
    %127 = vmatpush1.msra.mxu0 0.0
    %128 = vmatprep.subr.mxu0 0.0
    %129 = vmatpush1.msra.mxu0 0.0
    %130 = vmatprep.subr.mxu0 0.0
    %131 = vmatpush1.msra.mxu0 0.0
    %132 = vmatprep.subr.mxu0 0.0
    %133 = vmatpush1.msra.mxu0 0.0
    %134 = vmatprep.subr.mxu0 0.0
    %135 = vmatpush1.msra.mxu0 0.0
    %136 = vmatprep.subr.mxu0 0.0
    %137 = vmatpush1.msra.mxu0 0.0
    %138 = vmatprep.subr.mxu0 0.0
    %139 = vmatpush1.msra.mxu0 0.0
    %140 = vmatprep.subr.mxu0 0.0
    %141 = vmatpush1.msra.mxu0 0.0
    %142 = vmatprep.subr.mxu0 0.0
    %143 = vmatpush1.msra.mxu0 0.0
    %144 = vmatprep.subr.mxu0 0.0
    %145 = vmatpush1.msra.mxu0 0.0
    %146 = vmatprep.subr.mxu0 0.0
    %147 = vmatpush1.msra.mxu0 0.0
    %148 = vmatprep.subr.mxu0 0.0
    %149 = vmatpush1.msra.mxu0 0.0
    %150 = vmatprep.subr.mxu0 0.0
    %151 = vmatpush1.msra.mxu0 0.0
    %152 = vmatprep.subr.mxu0 0.0
    %153 = vmatpush1.msra.mxu0 0.0
    %154 = vmatprep.mubr.f32.mxu0 0.0
    %155 = vmatmul.mubr.f32.gmra.mrb[0].mxu0 %v73
    %v156 = vpop.f32.mrb[0].mxu0
    %v157 = vadd.f32 0.0, %v156
    %v158 = vpop.f32.mrb[0].mxu0
    %159 = vdwg.mxu0
    %v160 = vadd.f32 %v72, %v157
    %161 = vst [vmem:[#allocation2] sm:$0xff] %v160
    // Predicated region
    $region38: #{tpu_custom_call.1} parent=1 // pred_check
      %p162 = pneg %p60
    $region39: #{tpu_custom_call.1} parent=1 // pred_check_branch
      %164 = sbr.rel (%p162) target = $region41
    $region40: #{tpu_custom_call.1} parent=1 // pred_region
      %v165 = vld [vmem:[#allocation2] sm:$0xff]
      %v166 = vtanh.pop %v165
      %v167 = vld [vmem:[#allocation8] sm:$0xff]
      %v168 = vld [vmem:[#allocation8 + $0x8] sm:$0xff]
      %v169 = vld [vmem:[#allocation8 + $0x10] sm:$0xff]
      %v170 = vld [vmem:[#allocation8 + $0x18] sm:$0xff]
      %v171 = vld [vmem:[#allocation8 + $0x20] sm:$0xff]
      %v172 = vld [vmem:[#allocation8 + $0x28] sm:$0xff]
      %v173 = vld [vmem:[#allocation8 + $0x30] sm:$0xff]
      %v174 = vld [vmem:[#allocation8 + $0x38] sm:$0xff]
      %v175 = vld [vmem:[#allocation8 + $0x40] sm:$0xff]
      %v176 = vld [vmem:[#allocation8 + $0x48] sm:$0xff]
      %v177 = vld [vmem:[#allocation8 + $0x50] sm:$0xff]
      %v178 = vld [vmem:[#allocation8 + $0x58] sm:$0xff]
      %v179 = vld [vmem:[#allocation8 + $0x60] sm:$0xff]
      %v180 = vld [vmem:[#allocation8 + $0x68] sm:$0xff]
      %v181 = vld [vmem:[#allocation8 + $0x70] sm:$0xff]
      %v182 = vld [vmem:[#allocation8 + $0x78] sm:$0xff]
      %v183 = vld [vmem:[%s4] sm:$0x1]
      %v185 = vlaneseq
      %v186 = vshrl.u32 %v185, 7
      %v187 = vsub.s32 0, %v186
      %v188 = vrot.slane %v183, %v187
      %190 = vmatprep.subr.mxu0 0.0
      %191 = vmatpush1.msra.mxu0 %v167
      %192 = vmatprep.subr.mxu0 0.0
      %193 = vmatpush1.msra.mxu0 %v168
      %194 = vmatprep.subr.mxu0 0.0
      %195 = vmatpush1.msra.mxu0 %v169
      %196 = vmatprep.subr.mxu0 0.0
      %197 = vmatpush1.msra.mxu0 %v170
      %198 = vmatprep.subr.mxu0 0.0
      %199 = vmatpush1.msra.mxu0 %v171
      %200 = vmatprep.subr.mxu0 0.0
      %201 = vmatpush1.msra.mxu0 %v172
      %202 = vmatprep.subr.mxu0 0.0
      %203 = vmatpush1.msra.mxu0 %v173
      %204 = vmatprep.subr.mxu0 0.0
      %205 = vmatpush1.msra.mxu0 %v174
      %206 = vmatprep.subr.mxu0 0.0
      %207 = vmatpush1.msra.mxu0 %v175
      %208 = vmatprep.subr.mxu0 0.0
      %209 = vmatpush1.msra.mxu0 %v176
      %210 = vmatprep.subr.mxu0 0.0
      %211 = vmatpush1.msra.mxu0 %v177
      %212 = vmatprep.subr.mxu0 0.0
      %213 = vmatpush1.msra.mxu0 %v178
      %214 = vmatprep.subr.mxu0 0.0
      %215 = vmatpush1.msra.mxu0 %v179
      %216 = vmatprep.subr.mxu0 0.0
      %217 = vmatpush1.msra.mxu0 %v180
      %218 = vmatprep.subr.mxu0 0.0
      %219 = vmatpush1.msra.mxu0 %v181
      %220 = vmatprep.subr.mxu0 0.0
      %221 = vmatpush1.msra.mxu0 %v182
      %222 = vmatprep.subr.mxu0 0.0
      %223 = vmatpush1.msra.mxu0 0.0
      %224 = vmatprep.subr.mxu0 0.0
      %225 = vmatpush1.msra.mxu0 0.0
      %226 = vmatprep.subr.mxu0 0.0
      %227 = vmatpush1.msra.mxu0 0.0
      %228 = vmatprep.subr.mxu0 0.0
      %229 = vmatpush1.msra.mxu0 0.0
      %230 = vmatprep.subr.mxu0 0.0
      %231 = vmatpush1.msra.mxu0 0.0
      %232 = vmatprep.subr.mxu0 0.0
      %233 = vmatpush1.msra.mxu0 0.0
      %234 = vmatprep.subr.mxu0 0.0
      %235 = vmatpush1.msra.mxu0 0.0
      %236 = vmatprep.subr.mxu0 0.0
      %237 = vmatpush1.msra.mxu0 0.0
      %238 = vmatprep.subr.mxu0 0.0
      %239 = vmatpush1.msra.mxu0 0.0
      %240 = vmatprep.subr.mxu0 0.0
      %241 = vmatpush1.msra.mxu0 0.0
      %242 = vmatprep.subr.mxu0 0.0
      %243 = vmatpush1.msra.mxu0 0.0
      %244 = vmatprep.subr.mxu0 0.0
      %245 = vmatpush1.msra.mxu0 0.0
      %246 = vmatprep.subr.mxu0 0.0
      %247 = vmatpush1.msra.mxu0 0.0
      %248 = vmatprep.subr.mxu0 0.0
      %249 = vmatpush1.msra.mxu0 0.0
      %250 = vmatprep.subr.mxu0 0.0
      %251 = vmatpush1.msra.mxu0 0.0
      %252 = vmatprep.subr.mxu0 0.0
      %253 = vmatpush1.msra.mxu0 0.0
      %254 = vmatprep.mubr.f32.mxu0 0.0
      %255 = vmatmul.mubr.f32.gmra.mrb[0].mxu0 %v166
      %v256 = vpop.f32.mrb[0].mxu0
      %v257 = vadd.f32 %v188, %v256
      %v258 = vpop.f32.mrb[0].mxu0
      %259 = vdwg.mxu0
      %v260 = vtanh.pop %v257
      %s261 = scalar_lea.vmem [#allocation8], 128
      %v262 = vld [vmem:[%s261] sm:$0xff]
      %v263 = vld [vmem:[%s261 + $0x8] sm:$0xff]
      %v264 = vld [vmem:[%s261 + $0x10] sm:$0xff]
      %v265 = vld [vmem:[%s261 + $0x18] sm:$0xff]
      %v266 = vld [vmem:[%s261 + $0x20] sm:$0xff]
      %v267 = vld [vmem:[%s261 + $0x28] sm:$0xff]
      %v268 = vld [vmem:[%s261 + $0x30] sm:$0xff]
      %v269 = vld [vmem:[%s261 + $0x38] sm:$0xff]
      %v270 = vld [vmem:[%s261 + $0x40] sm:$0xff]
      %v271 = vld [vmem:[%s261 + $0x48] sm:$0xff]
      %v272 = vld [vmem:[%s261 + $0x50] sm:$0xff]
      %v273 = vld [vmem:[%s261 + $0x58] sm:$0xff]
      %v274 = vld [vmem:[%s261 + $0x60] sm:$0xff]
      %v275 = vld [vmem:[%s261 + $0x68] sm:$0xff]
      %v276 = vld [vmem:[%s261 + $0x70] sm:$0xff]
      %v277 = vld [vmem:[%s261 + $0x78] sm:$0xff]
      %s278 = scalar_lea.vmem %s4, 1
      %v279 = vld [vmem:[%s278] sm:$0x1]
      %v281 = vlaneseq
      %v282 = vshrl.u32 %v281, 7
      %v283 = vsub.s32 0, %v282
      %v284 = vrot.slane %v279, %v283
      %286 = vmatprep.subr.mxu0 0.0
      %287 = vmatpush1.msra.mxu0 %v262
      %288 = vmatprep.subr.mxu0 0.0
      %289 = vmatpush1.msra.mxu0 %v263
      %290 = vmatprep.subr.mxu0 0.0
      %291 = vmatpush1.msra.mxu0 %v264
      %292 = vmatprep.subr.mxu0 0.0
      %293 = vmatpush1.msra.mxu0 %v265
      %294 = vmatprep.subr.mxu0 0.0
      %295 = vmatpush1.msra.mxu0 %v266
      %296 = vmatprep.subr.mxu0 0.0
      %297 = vmatpush1.msra.mxu0 %v267
      %298 = vmatprep.subr.mxu0 0.0
      %299 = vmatpush1.msra.mxu0 %v268
      %300 = vmatprep.subr.mxu0 0.0
      %301 = vmatpush1.msra.mxu0 %v269
      %302 = vmatprep.subr.mxu0 0.0
      %303 = vmatpush1.msra.mxu0 %v270
      %304 = vmatprep.subr.mxu0 0.0
      %305 = vmatpush1.msra.mxu0 %v271
      %306 = vmatprep.subr.mxu0 0.0
      %307 = vmatpush1.msra.mxu0 %v272
      %308 = vmatprep.subr.mxu0 0.0
      %309 = vmatpush1.msra.mxu0 %v273
      %310 = vmatprep.subr.mxu0 0.0
      %311 = vmatpush1.msra.mxu0 %v274
      %312 = vmatprep.subr.mxu0 0.0
      %313 = vmatpush1.msra.mxu0 %v275
      %314 = vmatprep.subr.mxu0 0.0
      %315 = vmatpush1.msra.mxu0 %v276
      %316 = vmatprep.subr.mxu0 0.0
      %317 = vmatpush1.msra.mxu0 %v277
      %318 = vmatprep.subr.mxu0 0.0
      %319 = vmatpush1.msra.mxu0 0.0
      %320 = vmatprep.subr.mxu0 0.0
      %321 = vmatpush1.msra.mxu0 0.0
      %322 = vmatprep.subr.mxu0 0.0
      %323 = vmatpush1.msra.mxu0 0.0
      %324 = vmatprep.subr.mxu0 0.0
      %325 = vmatpush1.msra.mxu0 0.0
      %326 = vmatprep.subr.mxu0 0.0
      %327 = vmatpush1.msra.mxu0 0.0
      %328 = vmatprep.subr.mxu0 0.0
      %329 = vmatpush1.msra.mxu0 0.0
      %330 = vmatprep.subr.mxu0 0.0
      %331 = vmatpush1.msra.mxu0 0.0
      %332 = vmatprep.subr.mxu0 0.0
      %333 = vmatpush1.msra.mxu0 0.0
      %334 = vmatprep.subr.mxu0 0.0
      %335 = vmatpush1.msra.mxu0 0.0
      %336 = vmatprep.subr.mxu0 0.0
      %337 = vmatpush1.msra.mxu0 0.0
      %338 = vmatprep.subr.mxu0 0.0
      %339 = vmatpush1.msra.mxu0 0.0
      %340 = vmatprep.subr.mxu0 0.0
      %341 = vmatpush1.msra.mxu0 0.0
      %342 = vmatprep.subr.mxu0 0.0
      %343 = vmatpush1.msra.mxu0 0.0
      %344 = vmatprep.subr.mxu0 0.0
      %345 = vmatpush1.msra.mxu0 0.0
      %346 = vmatprep.subr.mxu0 0.0
      %347 = vmatpush1.msra.mxu0 0.0
      %348 = vmatprep.subr.mxu0 0.0
      %349 = vmatpush1.msra.mxu0 0.0
      %350 = vmatprep.mubr.f32.mxu0 0.0
      %351 = vmatmul.mubr.f32.gmra.mrb[0].mxu0 %v260
      %v352 = vpop.f32.mrb[0].mxu0
      %v353 = vadd.f32 %v284, %v352
      %v354 = vpop.f32.mrb[0].mxu0
      %355 = vdwg.mxu0
      %356 = vst [vmem:[#allocation9] sm:$0xff] %v353
    $region41: #{tpu_custom_call.1} parent=1 // pred_fallthru
      _
    // Predicated region
    $region42: #{tpu_custom_call.1} parent=1 // pred_check
      _
    $region43: #{tpu_custom_call.1} parent=1 // pred_check_branch
      %358 = sbr.rel (0) target = $region45
    $region44: #{tpu_custom_call.1} parent=1 // pred_region
      %s360 = ssub.s32 128, 128
      %361 = vsyncadd [#allocation5], %s360
      %s363 = sshll.u32 [#allocation9], 4
      %s364 = int_to_ptr.vmem [resolvable:$true] %s363
      %366 = dma.vmem_to_hbm [thread:$0]  %s364, 128, %s5, [#allocation5]
    $region45: #{tpu_custom_call.1} parent=1 // pred_fallthru
      _
    // Predicated region
    $region46: #{tpu_custom_call.1} parent=1 // pred_check
      _
    $region47: #{tpu_custom_call.1} parent=1 // pred_check_branch
      %368 = sbr.rel (0) target = $region49
    $region48: #{tpu_custom_call.1} parent=1 // pred_region
      %369 = dma.done [#allocation5], 128
    $region49: #{tpu_custom_call.1} parent=1 // pred_fallthru
      _
    %370 = vsyncpa [#allocation4], 1
    %371 = vsyncpa [#allocation7], 1
    %372 = vsyncpa [#allocation5], 1

</llo_original>
